<compile_context>
chip_gen: v6e
topology: v6e:2x2x1
jax: 0.10.0
libtpu: 0.0.40
codegen_flags: <defaults>
</compile_context>

<pallas_src>
import jax
import jax.numpy as jnp
from jax.experimental import pallas as pl
from jax.experimental.pallas import tpu as pltpu

_EPS = 1e-9  # matches LayerNorm(epsilon=1e-09) in the PyTorch module


def sublayer_kernel(x_ref, w_ref, b_ref, o_ref):
    # x_ref: [TM, D] f32
    # w_ref: [D, D]  bf16  (gamma already folded in:  gamma[:,None] * W)
    # b_ref: [1, D]  f32   (beta @ W + b already folded in)
    x = x_ref[...].astype(jnp.float32)
    D = x.shape[-1]

    # --- LayerNorm statistics (torch.std semantics: unbiased var, eps on std) ---
    mean = jnp.mean(x, axis=-1, keepdims=True)
    xc = x - mean
    denom = max(D - 1, 1)                                  # guard D == 1 edge case
    std = jnp.sqrt(jnp.sum(xc * xc, axis=-1, keepdims=True) / denom)
    inv = pl.reciprocal(std + _EPS, approx=True)           # EUP slot, not VALU
    normed = xc * inv                                      # gamma/beta live in W'/b'

    # --- sublayer: Linear(D, D) on the MXU, bf16 operands, f32 accumulation ---
    y = jnp.dot(normed.astype(jnp.bfloat16), w_ref[...],
                preferred_element_type=jnp.float32)
    y = y + b_ref[...]

    # (dropout = identity in eval mode)

    # --- residual add ---
    o_ref[...] = (x + y).astype(o_ref.dtype)


def _round_down_mult8(n):
    return max(8, (n // 8) * 8)


def sublayer_connection(x, w, b, gamma, beta, *, tile_m=1024):
    """x: [B, S, D] float32. Returns x + Linear(LayerNorm(x)) (eval-mode dropout)."""
    B, S, D = x.shape
    M = B * S
    x2d = x.reshape(M, D)  # contiguous reshape: no extra HBM pass

    # Fold the LayerNorm affine into the matmul operands (fold in f32, W' in bf16).
    w_f32 = w.astype(jnp.float32)
    w_fold = (gamma.astype(jnp.float32)[:, None] * w_f32).astype(jnp.bfloat16)
    b_fold = (beta.astype(jnp.float32) @ w_f32 + b.astype(jnp.float32)).reshape(1, D)

    # Generation-aware VMEM budget (v5e/v6e: 128 MiB physical, v7x: 64 MiB).
    try:
        vmem_cap = int(pltpu.get_tpu_info().vmem_capacity_bytes)
    except Exception:  # pragma: no cover - conservative fallback
        vmem_cap = 64 << 20
    vmem_budget = int(vmem_cap * 0.80)        # ~20% headroom for Mosaic internals

    headroom = 2 << 20
    resident_bytes = D * D * 2 + 8 * D * 4    # single-buffered bf16 W' + bias row

    def tiles_bytes(tm):                      # 2 x-buffers + 2 out-buffers (f32)
        return 4 * tm * D * 4

    # Row tile: as large as fits (multiple of 8), or the whole array if tiny.
    tm = min(int(tile_m), M)
    if tm < M:
        tm = _round_down_mult8(tm)
    while tm > 8 and resident_bytes + tiles_bytes(tm) + headroom > vmem_budget:
        tm = _round_down_mult8(tm // 2)
    # Keep >= 2 row blocks for moderate M so v7x's two TensorCores both get work.
    if M >= 16 and pl.cdiv(M, tm) < 2:
        tm = _round_down_mult8(pl.cdiv(M, 2) + 7)   # ceil(M/2) rounded up to mult of 8

    n_blocks = pl.cdiv(M, tm)  # ragged last block is handled by Pallas masking;
                               # LayerNorm / row-wise matmul are row-independent,
                               # so padding garbage never contaminates valid rows.

    vmem_bytes = int(min(vmem_budget,
                         max(resident_bytes + tiles_bytes(tm) + headroom, 4 << 20)))

    out2d = pl.pallas_call(
        sublayer_kernel,
        out_shape=jax.ShapeDtypeStruct((M, D), x.dtype),
        grid=(n_blocks,),
        in_specs=[
            # streamed row tile (default double-buffered pipelining)
            pl.BlockSpec((tm, D), lambda i: (i, 0)),
            # VMEM-resident operands: constant index_map -> single buffer
            pl.BlockSpec((D, D), lambda i: (0, 0), pipeline_mode=pl.Buffered(1)),
            pl.BlockSpec((1, D), lambda i: (0, 0), pipeline_mode=pl.Buffered(1)),
        ],
        out_specs=pl.BlockSpec((tm, D), lambda i: (i, 0)),
        compiler_params=pltpu.CompilerParams(
            dimension_semantics=("parallel",),
            vmem_limit_bytes=vmem_bytes,
        ),
    )(x2d, w_fold, b_fold)

    return out2d.reshape(B, S, D)


def reference(x, w, b, gamma, beta):
    D = x.shape[-1]
    mean = jnp.mean(x, axis=-1, keepdims=True)
    xc = x - mean
    std = jnp.sqrt(jnp.sum(xc * xc, axis=-1, keepdims=True) / max(D - 1, 1))
    normed = gamma * (xc / (std + _EPS)) + beta
    return x + (normed @ w + b)


if __name__ == "__main__":
    B, S, D = 2, 8, 32
    key = jax.random.PRNGKey(0)
    kx, kw, kb = jax.random.split(key, 3)

    x = jax.random.normal(kx, (B, S, D), dtype=jnp.float32)
    # Deterministic synthetic sublayer (Linear(D, D)) parameters.
    w = jax.random.normal(kw, (D, D), dtype=jnp.float32) * 0.05
    b = jax.random.normal(kb, (D,), dtype=jnp.float32) * 0.05
    # LayerNorm params (init: gamma=1, beta=0).
    gamma = jnp.ones((D,), dtype=jnp.float32)
    beta = jnp.zeros((D,), dtype=jnp.float32)

    out = sublayer_connection(x, w, b, gamma, beta)
    jax.block_until_ready(out)

    ref = reference(x, w, b, gamma, beta)
    assert out.shape == (B, S, D)
    # Tolerance loosened vs. pure-f32 because the MXU operands are bf16 and
    # the reciprocal is the EUP approx path.
    assert jnp.allclose(out, ref, atol=2e-2, rtol=2e-2), (
        float(jnp.max(jnp.abs(out - ref))))
    print("KERNEL_OK")
</pallas_src>

<mosaic_0001>
module attributes {stable_mosaic.version = 11 : i64} {
  func.func @sublayer_kernel(%arg0: i32, %arg1: memref<8x32xf32, #tpu.memory_space<vmem>>, %arg2: memref<32x32xbf16, #tpu.memory_space<vmem>>, %arg3: memref<1x32xf32, #tpu.memory_space<vmem>>, %arg4: memref<8x32xf32, #tpu.memory_space<vmem>>) attributes {dimension_semantics = [#tpu.dimension_semantics<parallel>], iteration_bounds = array<i64: 2>, scalar_prefetch = 0 : i64, scratch_operands = 0 : i64, tpu.core_type = #tpu.core_type<tc>, window_params = [{transform_indices = @transform_0, window_bounds = array<i64: 8, 32>}, {pipeline_mode = #tpu.pipeline_mode<synchronous>, transform_indices = @transform_1, window_bounds = array<i64: 32, 32>}, {pipeline_mode = #tpu.pipeline_mode<synchronous>, transform_indices = @transform_2, window_bounds = array<i64: 1, 32>}, {transform_indices = @transform_3, window_bounds = array<i64: 8, 32>}]} {
    %c0 = arith.constant 0 : index
    %c0_0 = arith.constant 0 : index
    %0 = vector.load %arg1[%c0, %c0_0] : memref<8x32xf32, #tpu.memory_space<vmem>>, vector<8x32xf32>
    %cst = arith.constant dense<0.000000e+00> : vector<8xf32>
    %1 = vector.multi_reduction <add>, %0, %cst [1] : vector<8x32xf32> to vector<8xf32>
    %2 = vector.shape_cast %1 : vector<8xf32> to vector<8x1xf32>
    %cst_1 = arith.constant 3.200000e+01 : f32
    %3 = vector.broadcast %cst_1 : f32 to vector<8x1xf32>
    %4 = arith.divf %2, %3 : vector<8x1xf32>
    %5 = vector.broadcast %4 : vector<8x1xf32> to vector<8x32xf32>
    %6 = arith.subf %0, %5 : vector<8x32xf32>
    %7 = arith.mulf %6, %6 : vector<8x32xf32>
    %cst_2 = arith.constant dense<0.000000e+00> : vector<8xf32>
    %8 = vector.multi_reduction <add>, %7, %cst_2 [1] : vector<8x32xf32> to vector<8xf32>
    %9 = vector.shape_cast %8 : vector<8xf32> to vector<8x1xf32>
    %cst_3 = arith.constant 3.100000e+01 : f32
    %10 = vector.broadcast %cst_3 : f32 to vector<8x1xf32>
    %11 = arith.divf %9, %10 : vector<8x1xf32>
    %12 = math.sqrt %11 : vector<8x1xf32>
    %cst_4 = arith.constant 9.99999971E-10 : f32
    %13 = vector.broadcast %cst_4 : f32 to vector<8x1xf32>
    %14 = arith.addf %12, %13 : vector<8x1xf32>
    %15 = tpu.reciprocal %14 {approx = true} : vector<8x1xf32> -> vector<8x1xf32>
    %16 = vector.broadcast %15 : vector<8x1xf32> to vector<8x32xf32>
    %17 = arith.mulf %6, %16 : vector<8x32xf32>
    %18 = arith.truncf %17 : vector<8x32xf32> to vector<8x32xbf16>
    %c0_5 = arith.constant 0 : index
    %c0_6 = arith.constant 0 : index
    %19 = vector.load %arg2[%c0_5, %c0_6] : memref<32x32xbf16, #tpu.memory_space<vmem>>, vector<32x32xbf16>
    %cst_7 = arith.constant dense<0.000000e+00> : vector<8x32xf32>
    %20 = tpu.matmul %18, %19, %cst_7 {dimension_numbers = #tpu.dot_dimension_numbers<[1], [0], [0], [1], [0, 0, 1, 1], [], []>} : vector<8x32xbf16>, vector<32x32xbf16>, vector<8x32xf32> -> vector<8x32xf32>
    %c0_8 = arith.constant 0 : index
    %c0_9 = arith.constant 0 : index
    %21 = vector.load %arg3[%c0_8, %c0_9] : memref<1x32xf32, #tpu.memory_space<vmem>>, vector<1x32xf32>
    %22 = vector.broadcast %21 : vector<1x32xf32> to vector<8x32xf32>
    %23 = arith.addf %20, %22 : vector<8x32xf32>
    %24 = arith.addf %0, %23 : vector<8x32xf32>
    %c0_10 = arith.constant 0 : index
    %c0_11 = arith.constant 0 : index
    %25 = vector.load %arg4[%c0_10, %c0_11] : memref<8x32xf32, #tpu.memory_space<vmem>>, vector<8x32xf32>
    tpu.vector_store %arg4[%c0_10, %c0_11], %24 {strides = array<i32>} : memref<8x32xf32, #tpu.memory_space<vmem>>, vector<8x32xf32>,
    return
  }
  func.func @transform_0(%arg0: i32) -> (i32, i32) {
    %c0_i32 = arith.constant 0 : i32
    %c0_i32_0 = arith.constant 0 : i32
    return %arg0, %c0_i32 : i32, i32
  }
  func.func @transform_1(%arg0: i32) -> (i32, i32) {
    %c0_i32 = arith.constant 0 : i32
    %c0_i32_0 = arith.constant 0 : i32
    %c0_i32_1 = arith.constant 0 : i32
    return %c0_i32, %c0_i32_0 : i32, i32
  }
  func.func @transform_2(%arg0: i32) -> (i32, i32) {
    %c0_i32 = arith.constant 0 : i32
    %c0_i32_0 = arith.constant 0 : i32
    %c0_i32_1 = arith.constant 0 : i32
    return %c0_i32, %c0_i32_0 : i32, i32
  }
  func.func @transform_3(%arg0: i32) -> (i32, i32) {
    %c0_i32 = arith.constant 0 : i32
    %c0_i32_0 = arith.constant 0 : i32
    return %arg0, %c0_i32 : i32, i32
  }
}

</mosaic_0001>

<llo_original>
// kernel: tpu_custom_call.1
$region0: #{tpu_custom_call.1}
  #allocation0 [shape = 'u32[]', space=smem, size = 0x4, offset = 0x4, fixed_abs, tag = 'smem constant byte address 0x4 - core index']
  #allocation1 [shape = 'u32[144,128]{1,0:T(1,128)}', space=vmem, size = 0x12000, scoped, tag = 'internal scratch']
  %s0 = inlined_call_operand.hbm [shape: f32[16,32], index: 0, kind: input, shape index: {}]
  %s1 = inlined_call_operand.hbm [shape: bf16[32,32], index: 1, kind: input, shape index: {}]
  %s2 = inlined_call_operand.vmem [shape: f32[1,32], index: 2, kind: input, shape index: {}]
  %s3 = inlined_call_operand.hbm [shape: f32[16,32], index: 3, kind: output, shape index: {}]
  %s4 = sld [smem:[#allocation0]]
  $region53: #{tpu_custom_call.1} parent=0
    _
  %s6 = ssub.s32 1, %s4
  %s7 = scalar_select 0, %s6, %s4
  $region1: #{tpu_custom_call.1} parent=0
    #allocation2 [shape = 'u8[8192]{0}', space=vmem, size = 0x2000, scoped, tag = 'input window, operand 0']
    #allocation3 [shape = 's32[2]{0}', space=sflag, size = 0x8, scoped, tag = 'scoped memory for tpu_custom_call.1']
    #allocation4 [shape = 's32[2]{0}', space=sflag, size = 0x8, scoped, tag = 'scoped memory for tpu_custom_call.1']
    #allocation5 [shape = 'u8[8192]{0}', space=vmem, size = 0x2000, scoped, tag = 'input window, operand 1, single buffered']
    #allocation6 [shape = 's32[1]{0}', space=sflag, size = 0x4, scoped, tag = 'scoped memory for tpu_custom_call.1']
    #allocation7 [shape = 'u8[8192]{0}', space=vmem, size = 0x2000, scoped, tag = 'output window, operand 0']
    %8 = vsyncpa [#allocation3], 0
    %s9 = scalar_lea.sflag [#allocation3], 1
    %10 = vsyncpa %s9, 0
    %11 = vsyncpa [#allocation6], 0
    %12 = vsyncpa [#allocation4], 0
    %s13 = scalar_lea.sflag [#allocation4], 1
    %14 = vsyncpa %s13, 0
    loop: start=0, step=1, limit=4
    $region2: #{tpu_custom_call.1} parent=1 // loop_pre_header
      _
    $region3: #{tpu_custom_call.1} parent=1 // loop_header
      %s16 = sphi 0, %s20
      %p17 = scmp.ge.s32.totalorder %s16, 4
      %s26 = sphi 0, %s28
      %s29 = sphi 0, %s26
      %s30 = sphi 0, %s29
      %s46 = sphi 0, %s30
      %s50 = sphi 0, %s50
      %s52 = sphi 0, %s50
      %s53 = sphi 0, %s52
      %s67 = sphi 0, %s53
      %s71 = sphi 0, %s71
      %s73 = sphi 0, %s71
      %s74 = sphi 0, %s73
      %s88 = sphi 0, %s74
      %s94 = sphi 0, %s96
      %s97 = sphi 0, %s94
      %s98 = sphi 0, %s97
      %s114 = sphi 0, %s98
    $region4: #{tpu_custom_call.1} parent=1 // loop_header_branch
      %19 = sbr.rel (%p17) target = $region8
    $region5: #{tpu_custom_call.1} parent=1 // loop_body
      %s21 = ssub.s32 %s16, 1
      %s22 = ssub.s32 %s16, 2
      %s23 = sadd.s32 %s16, 1
      %s24 = ssub.s32 %s16, %s23
      %p25 = scmp.eq.s32.totalorder %s24, 0
      %s27 = sadd.s32 %s26, 1
      %s28 = scalar_select %p25, %s26, %s27
      %p31 = pneg %p25
      %p32 = scmp.eq.s32.totalorder %s16, 1
      %p33 = por %p31, %p32
      %p34 = scmp.ne.s32.totalorder %s26, %s29
      %p35 = scmp.eq.s32.totalorder %s16, 0
      %p36 = por %p34, %p35
      %p37 = scmp.ne.s32.totalorder %s26, %s29
      %p38 = scmp.eq.s32.totalorder %s21, 1
      %p39 = por %p37, %p38
      %p40 = scmp.ne.s32.totalorder %s29, %s30
      %p41 = scmp.eq.s32.totalorder %s21, 0
      %p42 = por %p40, %p41
      %p43 = scmp.ne.s32.totalorder %s29, %s30
      %p44 = scmp.eq.s32.totalorder %s22, 1
      %p45 = por %p43, %p44
      %p47 = scmp.ne.s32.totalorder %s30, %s46
      %p48 = scmp.eq.s32.totalorder %s22, 0
      %p49 = por %p47, %p48
      %s51 = sadd.s32 %s50, 1
      %p54 = scmp.eq.s32.totalorder %s16, 1
      %p55 = scmp.ne.s32.totalorder %s50, %s52
      %p56 = scmp.eq.s32.totalorder %s16, 0
      %p57 = por %p55, %p56
      %p58 = scmp.ne.s32.totalorder %s50, %s52
      %p59 = scmp.eq.s32.totalorder %s21, 1
      %p60 = por %p58, %p59
      %p61 = scmp.ne.s32.totalorder %s52, %s53
      %p62 = scmp.eq.s32.totalorder %s21, 0
      %p63 = por %p61, %p62
      %p64 = scmp.ne.s32.totalorder %s52, %s53
      %p65 = scmp.eq.s32.totalorder %s22, 1
      %p66 = por %p64, %p65
      %p68 = scmp.ne.s32.totalorder %s53, %s67
      %p69 = scmp.eq.s32.totalorder %s22, 0
      %p70 = por %p68, %p69
      %s72 = sadd.s32 %s71, 1
      %p75 = scmp.eq.s32.totalorder %s16, 1
      %p76 = scmp.ne.s32.totalorder %s71, %s73
      %p77 = scmp.eq.s32.totalorder %s16, 0
      %p78 = por %p76, %p77
      %p79 = scmp.ne.s32.totalorder %s71, %s73
      %p80 = scmp.eq.s32.totalorder %s21, 1
      %p81 = por %p79, %p80
      %p82 = scmp.ne.s32.totalorder %s73, %s74
      %p83 = scmp.eq.s32.totalorder %s21, 0
      %p84 = por %p82, %p83
      %p85 = scmp.ne.s32.totalorder %s73, %s74
      %p86 = scmp.eq.s32.totalorder %s22, 1
      %p87 = por %p85, %p86
      %p89 = scmp.ne.s32.totalorder %s74, %s88
      %p90 = scmp.eq.s32.totalorder %s22, 0
      %p91 = por %p89, %p90
      %s92 = ssub.s32 %s16, %s23
      %p93 = scmp.eq.s32.totalorder %s92, 0
      %s95 = sadd.s32 %s94, 1
      %s96 = scalar_select %p93, %s94, %s95
      %p99 = pneg %p93
      %p100 = scmp.eq.s32.totalorder %s16, 1
      %p101 = por %p99, %p100
      %p102 = scmp.ne.s32.totalorder %s94, %s97
      %p103 = scmp.eq.s32.totalorder %s16, 0
      %p104 = por %p102, %p103
      %p105 = scmp.ne.s32.totalorder %s94, %s97
      %p106 = scmp.eq.s32.totalorder %s21, 1
      %p107 = por %p105, %p106
      %p108 = scmp.ne.s32.totalorder %s97, %s98
      %p109 = scmp.eq.s32.totalorder %s21, 0
      %p110 = por %p108, %p109
      %p111 = scmp.ne.s32.totalorder %s97, %s98
      %p112 = scmp.eq.s32.totalorder %s22, 1
      %p113 = por %p111, %p112
      %p115 = scmp.ne.s32.totalorder %s98, %s114
      %p116 = scmp.eq.s32.totalorder %s22, 0
      %p117 = por %p115, %p116
      %p118 = scmp.le.s32.totalorder 1, %s16
      %p119 = scmp.lt.s32.totalorder %s16, 3
      %p120 = pnand %p118, %p119
      %p121 = pneg %p120
      // Predicated region
      $region9: #{tpu_custom_call.1} parent=5 // pred_check
        _
      $region10: #{tpu_custom_call.1} parent=5 // pred_check_branch
        %123 = sbr.rel (%p120) target = $region12
      $region11: #{tpu_custom_call.1} parent=5 // pred_region
        %s124 = ssub.s32 %s16, 1
        // Predicated region
        $region13: #{tpu_custom_call.1} parent=11 // pred_check
          %p125 = pneg %p63
        $region14: #{tpu_custom_call.1} parent=11 // pred_check_branch
          %127 = sbr.rel (%p125) target = $region16
        $region15: #{tpu_custom_call.1} parent=11 // pred_region
          %s129 = ssub.s32 256, 256
          %130 = vsyncadd [#allocation6], %s129
          %s131 = sshll.u32 [#allocation5], 4
          %s132 = int_to_ptr.vmem [resolvable:$true] %s131
          %137 = dma.hbm_to_vmem [thread:$0]  %s1, 256, %s132, [#allocation6], 64, 64, 4
        $region16: #{tpu_custom_call.1} parent=11 // pred_fallthru
          _
        // Predicated region
        $region17: #{tpu_custom_call.1} parent=11 // pred_check
          %p138 = pneg %p84
        $region18: #{tpu_custom_call.1} parent=11 // pred_check_branch
          %140 = sbr.rel (%p138) target = $region20
        $region19: #{tpu_custom_call.1} parent=11 // pred_region
          _
        $region20: #{tpu_custom_call.1} parent=11 // pred_fallthru
          _
      $region12: #{tpu_custom_call.1} parent=5 // pred_fallthru
        _
      %p141 = scmp.lt.s32.totalorder %s16, 2
      // Predicated region
      $region21: #{tpu_custom_call.1} parent=5 // pred_check
        %p142 = pneg %p141
      $region22: #{tpu_custom_call.1} parent=5 // pred_check_branch
        %144 = sbr.rel (%p142) target = $region24
      $region23: #{tpu_custom_call.1} parent=5 // pred_region
        // Predicated region
        $region25: #{tpu_custom_call.1} parent=23 // pred_check
          %p145 = pneg %p36
        $region26: #{tpu_custom_call.1} parent=23 // pred_check_branch
          %147 = sbr.rel (%p145) target = $region28
        $region27: #{tpu_custom_call.1} parent=23 // pred_region
          %s148 = sand.u32 %s26, 1
          %s149 = scalar_lea.sflag [#allocation3], %s148
          %s150 = sand.u32 %s26, 1
          %s151 = smul.addr %s150, 8
          %s152 = scalar_lea.vmem [#allocation2], %s151
          %s154 = ssub.s32 128, 128
          %155 = vsyncadd %s149, %s154
          %s156 = smul.addr %s16, 128
          %s157 = scalar_lea.hbm %s0, %s156
          %s159 = sshll.u32 %s152, 4
          %s160 = int_to_ptr.vmem [resolvable:$true] %s159
          %162 = dma.hbm_to_vmem [thread:$0]  %s157, 128, %s160, %s149
        $region28: #{tpu_custom_call.1} parent=23 // pred_fallthru
          _
      $region24: #{tpu_custom_call.1} parent=5 // pred_fallthru
        _
      %p163 = scmp.le.s32.totalorder 1, %s16
      %p164 = scmp.lt.s32.totalorder %s16, 3
      %p165 = pnand %p163, %p164
      %p166 = pneg %p165
      // Predicated region
      $region29: #{tpu_custom_call.1} parent=5 // pred_check
        _
      $region30: #{tpu_custom_call.1} parent=5 // pred_check_branch
        %168 = sbr.rel (%p165) target = $region32
      $region31: #{tpu_custom_call.1} parent=5 // pred_region
        %s169 = ssub.s32 %s16, 1
        %s170 = sand.u32 %s29, 1
        %s171 = scalar_lea.sflag [#allocation3], %s170
        %s172 = sand.u32 %s29, 1
        %s173 = smul.addr %s172, 8
        %s174 = scalar_lea.vmem [#allocation2], %s173
        // Predicated region
        $region33: #{tpu_custom_call.1} parent=31 // pred_check
          %p175 = pneg %p42
        $region34: #{tpu_custom_call.1} parent=31 // pred_check_branch
          %177 = sbr.rel (%p175) target = $region36
        $region35: #{tpu_custom_call.1} parent=31 // pred_region
          %178 = dma.done %s171, 128
        $region36: #{tpu_custom_call.1} parent=31 // pred_fallthru
          _
        // Predicated region
        $region37: #{tpu_custom_call.1} parent=31 // pred_check
          %p179 = pneg %p63
        $region38: #{tpu_custom_call.1} parent=31 // pred_check_branch
          %181 = sbr.rel (%p179) target = $region40
        $region39: #{tpu_custom_call.1} parent=31 // pred_region
          %182 = dma.done [#allocation6], 256
        $region40: #{tpu_custom_call.1} parent=31 // pred_fallthru
          _
        %s183 = sand.u32 %s29, 1
        %s184 = scalar_lea.sflag [#allocation3], %s183
        %s185 = sand.u32 %s29, 1
        %s186 = smul.addr %s185, 8
        %s187 = scalar_lea.vmem [#allocation2], %s186
        %p188 = pneg %p42
        %p189 = pneg %p39
        %p190 = pneg %p63
        %p191 = pneg %p60
        %p192 = pneg %p84
        %p193 = pneg %p81
        %p194 = pneg %p110
        %p195 = pneg %p107
        %s196 = sand.u32 %s97, 1
        %s197 = scalar_lea.sflag [#allocation4], %s196
        %s198 = sand.u32 %s97, 1
        %s199 = smul.addr %s198, 8
        %s200 = scalar_lea.vmem [#allocation7], %s199
        %v202 = vld [vmem:[%s174] sm:$0xff]
        %vm203 = vcmask 261120
        %v204 = vsel %vm203, %v202, 0.0
        %205 = vadd.xlane.f32.xlu0 %v204
        %v206 = vpop.xlane.xlu0 %205
        %v207 = vrcp.pop 32.0
        %v208 = vmul.f32 %v206, %v207
        %v209 = vsub.f32 %v202, %v208
        %v210 = vmul.f32 %v209, %v209
        %v211 = vsel %vm203, %v210, 0.0
        %212 = vadd.xlane.f32.xlu0 %v211
        %v213 = vpop.xlane.xlu0 %212
        %v214 = vrcp.pop 31.0
        %v215 = vmul.f32 %v213, %v214
        %v216 = vrsqrt.pop %v215
        %v217 = vmul.f32 %v215, %v216
        %vm218 = vcmp.eq.f32.partialorder %v215, inf
        %v219 = vsel %vm218, %v215, %v217
        %vm220 = vcmp.eq.f32.partialorder %v215, 0.0
        %v221 = vand.u32 %v215, 2147483648
        %v222 = vsel %vm220, %v221, %v219
        %v223 = vadd.f32 %v222, 1e-09
        %v224 = vrcp.pop %v223
        %v225 = vmul.f32 %v209, %v224
        %v226 = vpack.c.bf16 %v225, %v225
        %v227 = vld [vmem:[#allocation5] sm:$0xf]
        %v228 = vld [vmem:[#allocation5 + $0x4] sm:$0xf]
        %v229 = vld [vmem:[#allocation5 + $0x8] sm:$0xf]
        %v230 = vld [vmem:[#allocation5 + $0xc] sm:$0xf]
        %v231 = vld [vmem:[%s2] sm:$0x1]
        %v233 = vlaneseq
        %v234 = vshrl.u32 %v233, 7
        %v235 = vsub.s32 0, %v234
        %v236 = vrot.slane %v231, %v235
        %v242 = vunpack.c.l.b16 %v227
        %v243 = vunpack.c.l.b16 %v228
        %v244 = vunpack.c.l.b16 %v229
        %v245 = vunpack.c.l.b16 %v230
        %v246 = vpack.c.b16 %v243, %v242
        %v247 = vpack.c.b16 %v245, %v244
        %v251 = vsel %vm203, %v226, 0
        %253 = vmatprep.subr.bf16.mxu0 0
        %254 = vmatpush1.bf16.msra.mxu0 0
        %255 = vmatprep.subr.bf16.mxu0 0
        %256 = vmatpush1.bf16.msra.mxu0 0
        %257 = vmatprep.subr.bf16.mxu0 0
        %258 = vmatpush1.bf16.msra.mxu0 0
        %259 = vmatprep.subr.bf16.mxu0 0
        %260 = vmatpush1.bf16.msra.mxu0 0
        %261 = vmatprep.subr.bf16.mxu0 0
        %262 = vmatpush1.bf16.msra.mxu0 0
        %263 = vmatprep.subr.bf16.mxu0 0
        %264 = vmatpush1.bf16.msra.mxu0 0
        %265 = vmatprep.subr.bf16.mxu0 0
        %266 = vmatpush1.bf16.msra.mxu0 %v247
        %267 = vmatprep.subr.bf16.mxu0 0
        %268 = vmatpush1.bf16.msra.mxu0 %v246
        %269 = vmatprep.subr.bf16.mxu0 0
        %270 = vmatpush2.bf16.msra.mxu0 0
        %271 = vmatprep.subr.bf16.mxu0 0
        %272 = vmatpush2.bf16.msra.mxu0 0
        %273 = vmatprep.subr.bf16.mxu0 0
        %274 = vmatpush2.bf16.msra.mxu0 0
        %275 = vmatprep.subr.bf16.mxu0 0
        %276 = vmatpush2.bf16.msra.mxu0 0
        %277 = vmatprep.subr.bf16.mxu0 0
        %278 = vmatpush2.bf16.msra.mxu0 0
        %279 = vmatprep.subr.bf16.mxu0 0
        %280 = vmatpush2.bf16.msra.mxu0 0
        %281 = vmatprep.subr.bf16.mxu0 0
        %282 = vmatpush2.bf16.msra.mxu0 0
        %283 = vmatprep.subr.bf16.mxu0 0
        %284 = vmatpush2.bf16.msra.mxu0 0
        %285 = vmatprep.mubr.bf16.mxu0 0
        %286 = vmatmul.mubr.bf16.gmra.mxu0 %v251
        %v287 = vpop.f32.mrf.mxu0
        %v288 = vadd.f32 %v236, %v287
        %v289 = vpop.f32.mrf.mxu0
        %v290 = vpop.f32.mrf.mxu0
        %v291 = vpop.f32.mrf.mxu0
        %292 = vdwg.mxu0
        %v293 = vadd.f32 %v202, %v288
        %294 = vst.msk [vmem:[%s200] sm:$0xff] %vm203, %v293
        %s295 = sand.u32 %s97, 1
        %s296 = scalar_lea.sflag [#allocation4], %s295
        %s297 = sand.u32 %s97, 1
        %s298 = smul.addr %s297, 8
        %s299 = scalar_lea.vmem [#allocation7], %s298
        // Predicated region
        $region41: #{tpu_custom_call.1} parent=31 // pred_check
          %p300 = pneg %p107
        $region42: #{tpu_custom_call.1} parent=31 // pred_check_branch
          %302 = sbr.rel (%p300) target = $region44
        $region43: #{tpu_custom_call.1} parent=31 // pred_region
          %s304 = ssub.s32 128, 128
          %305 = vsyncadd %s296, %s304
          %s306 = smul.addr %s21, 128
          %s307 = scalar_lea.hbm %s3, %s306
          %s309 = sshll.u32 %s299, 4
          %s310 = int_to_ptr.vmem [resolvable:$true] %s309
          %312 = dma.vmem_to_hbm [thread:$0]  %s310, 128, %s307, %s296
        $region44: #{tpu_custom_call.1} parent=31 // pred_fallthru
          _
      $region32: #{tpu_custom_call.1} parent=5 // pred_fallthru
        _
      %p313 = scmp.le.s32.totalorder 2, %s16
      // Predicated region
      $region45: #{tpu_custom_call.1} parent=5 // pred_check
        %p314 = pneg %p313
      $region46: #{tpu_custom_call.1} parent=5 // pred_check_branch
        %316 = sbr.rel (%p314) target = $region48
      $region47: #{tpu_custom_call.1} parent=5 // pred_region
        %s317 = ssub.s32 %s16, 2
        // Predicated region
        $region49: #{tpu_custom_call.1} parent=47 // pred_check
          %p318 = pneg %p113
        $region50: #{tpu_custom_call.1} parent=47 // pred_check_branch
          %320 = sbr.rel (%p318) target = $region52
        $region51: #{tpu_custom_call.1} parent=47 // pred_region
          %s321 = sand.u32 %s98, 1
          %s322 = scalar_lea.sflag [#allocation4], %s321
          %s323 = sand.u32 %s98, 1
          %s324 = smul.addr %s323, 8
          %s325 = scalar_lea.vmem [#allocation7], %s324
          %326 = dma.done %s322, 128
        $region52: #{tpu_custom_call.1} parent=47 // pred_fallthru
          _
      $region48: #{tpu_custom_call.1} parent=5 // pred_fallthru
        _
    $region6: #{tpu_custom_call.1} parent=1 // loop_footer
      %s20 = sadd.s32 1, %s16
    $region7: #{tpu_custom_call.1} parent=1 // loop_footer_branch
      %15 = sbr.rel target = $region3
    $region8: #{tpu_custom_call.1} parent=1 // loop_exit
      _
    %327 = vsyncpa [#allocation3], 1
    %s328 = scalar_lea.sflag [#allocation3], 1
    %329 = vsyncpa %s328, 1
    %330 = vsyncpa [#allocation6], 1
    %331 = vsyncpa [#allocation4], 1
    %s332 = scalar_lea.sflag [#allocation4], 1
    %333 = vsyncpa %s332, 1

</llo_original>
